<compile_context>
chip_gen: v6e
topology: v6e:2x2x1
jax: 0.10.0
libtpu: 0.0.40
codegen_flags: <defaults>
</compile_context>

<pallas_src>
import functools

import jax
import jax.numpy as jnp
from jax import lax
from jax.experimental import pallas as pl
from jax.experimental.pallas import tpu as pltpu

# Hidden layer widths fixed by the PyTorch module.
_H = (128, 128, 256, 256, 512)
_W_COLS = 512  # packed weight-slab width (= widest layer)


def _round_up(v, m):
    return (v + m - 1) // m * m


def _make_kernel(obs8, act8):
    """Build the fused forward kernel; slab offsets are static closure constants."""
    o_w1 = 0
    o_w6t = o_w1 + obs8
    o_w2 = o_w6t + act8
    o_w3 = o_w2 + _H[0]
    o_w4 = o_w3 + _H[1]
    o_w5 = o_w4 + _H[2]

    def kernel(x_ref, w_ref, b_ref, out_ref):
        bf16 = jnp.bfloat16
        f32 = jnp.float32
        dot = functools.partial(jnp.dot, preferred_element_type=f32)

        x = x_ref[...].astype(bf16)                         # (TB, obs8)

        # Static slices of the VMEM-resident parameter slabs (no runtime cost).
        w1 = w_ref[o_w1:o_w1 + obs8, 0:_H[0]]               # (obs8, 128)
        w6t = w_ref[o_w6t:o_w6t + act8, 0:_H[4]]            # (act8, 512)  (= w6.T)
        w2 = w_ref[o_w2:o_w2 + _H[0], 0:_H[1]]              # (128, 128)
        w3 = w_ref[o_w3:o_w3 + _H[1], 0:_H[2]]              # (128, 256)
        w4 = w_ref[o_w4:o_w4 + _H[2], 0:_H[3]]              # (256, 256)
        w5 = w_ref[o_w5:o_w5 + _H[3], 0:_H[4]]              # (256, 512)

        b1 = b_ref[0:1, 0:_H[0]]
        b2 = b_ref[1:2, 0:_H[1]]
        b3 = b_ref[2:3, 0:_H[2]]
        b4 = b_ref[3:4, 0:_H[3]]
        b5 = b_ref[4:5, 0:_H[4]]
        b6 = b_ref[5:6, 0:act8]

        # layer1 -> dropout(identity) -> relu
        h1 = jnp.maximum(dot(x, w1) + b1, 0.0).astype(bf16)             # (TB, 128)
        # layer2 + residual(h1) -> relu  (residual reuses the bf16 copy)
        h2 = jnp.maximum(dot(h1, w2) + b2 + h1.astype(f32), 0.0).astype(bf16)
        # layer3 -> dropout(identity) -> relu
        h3 = jnp.maximum(dot(h2, w3) + b3, 0.0).astype(bf16)            # (TB, 256)
        # layer4 + residual(h3) -> relu
        h4 = jnp.maximum(dot(h3, w4) + b4 + h3.astype(f32), 0.0).astype(bf16)
        # layer5 -> dropout(identity) -> relu
        h5 = jnp.maximum(dot(h4, w5) + b5, 0.0).astype(bf16)            # (TB, 512)
        # layer6 (no activation); w6 stored transposed -> rhs-transposed MXU dot
        out = lax.dot_general(h5, w6t, (((1,), (1,)), ((), ())),
                              preferred_element_type=f32) + b6          # (TB, act8)
        out_ref[...] = out.astype(out_ref.dtype)

    return kernel


def dqn_forward(x, params):
    """x: (B, n_observations) f32.  params: 6 (W, b) pairs, W stored (in, out)."""
    B, n_obs = x.shape
    n_actions = params[-1][0].shape[1]

    OBS8 = _round_up(n_obs, 8)        # sublane-align w1 rows / x feature dim
    ACT8 = _round_up(n_actions, 8)    # sublane-align output columns

    # Batch tile: >= 2 grid steps whenever B > 8 (keeps both v7x TCs busy via the
    # "parallel" axis); cap at 512 for large B (per-step overhead amortized, well
    # inside v5e's 16 MiB default scoped VMEM).
    if B <= 1024:
        TB = max(8, _round_up(-(-B // 2), 8))
    else:
        TB = 512
    B_pad = _round_up(B, TB)

    # Input kept at true feature width (no 128-lane padding); padded batch rows = 0.
    x_p = jnp.zeros((B_pad, OBS8), jnp.float32).at[:B, :n_obs].set(x)

    # One bf16 weight slab (w6 transposed) + one f32 bias slab.
    (w1, b1), (w2, b2), (w3, b3), (w4, b4), (w5, b5), (w6, b6) = params
    pieces = [w1, w6.T, w2, w3, w4, w5]
    rows = [OBS8, ACT8, _H[0], _H[1], _H[2], _H[3]]
    total_rows = _round_up(sum(rows), 16)   # bf16 sublane tile = 16

    w_slab = jnp.zeros((total_rows, _W_COLS), jnp.bfloat16)
    off = 0
    for p, r in zip(pieces, rows):
        w_slab = w_slab.at[off:off + p.shape[0], :p.shape[1]].set(p.astype(jnp.bfloat16))
        off += r

    b_slab = jnp.zeros((8, _W_COLS), jnp.float32)
    for li, b in enumerate([b1, b2, b3, b4, b5, b6]):
        b_slab = b_slab.at[li, :b.shape[0]].set(b.astype(jnp.float32))

    kernel = _make_kernel(OBS8, ACT8)
    grid = (B_pad // TB,)

    const = lambda i: (0, 0)
    in_specs = [
        pl.BlockSpec((TB, OBS8), lambda i: (i, 0)),   # streamed per batch tile
        pl.BlockSpec(w_slab.shape, const),            # VMEM-resident weights (1 DMA)
        pl.BlockSpec(b_slab.shape, const),            # VMEM-resident biases  (1 DMA)
    ]
    out_spec = pl.BlockSpec((TB, ACT8), lambda i: (i, 0))

    # Advisory cost estimate, consistent with what is actually DMA'd.
    mm_flops = 2 * B_pad * (OBS8 * _H[0] + _H[0] * _H[1] + _H[1] * _H[2]
                            + _H[2] * _H[3] + _H[3] * _H[4] + _H[4] * ACT8)
    bytes_accessed = (x_p.size * x_p.dtype.itemsize
                      + B_pad * ACT8 * 4
                      + w_slab.size * w_slab.dtype.itemsize
                      + b_slab.size * b_slab.dtype.itemsize)

    out = pl.pallas_call(
        kernel,
        out_shape=jax.ShapeDtypeStruct((B_pad, ACT8), jnp.float32),
        grid=grid,
        in_specs=in_specs,
        out_specs=out_spec,
        compiler_params=pltpu.CompilerParams(dimension_semantics=("parallel",)),
        cost_estimate=pl.CostEstimate(flops=mm_flops, transcendentals=0,
                                      bytes_accessed=bytes_accessed),
    )(x_p, w_slab, b_slab)

    return out[:B, :n_actions]


def init_params(key, n_observations, n_actions):
    """Deterministic PyTorch-style uniform(-1/sqrt(fan_in), 1/sqrt(fan_in)) init."""
    dims = [(n_observations, 128), (128, 128), (128, 256),
            (256, 256), (256, 512), (512, n_actions)]
    params = []
    for (fan_in, fan_out) in dims:
        key, kw, kb = jax.random.split(key, 3)
        bound = 1.0 / jnp.sqrt(jnp.float32(fan_in))
        w = jax.random.uniform(kw, (fan_in, fan_out), jnp.float32, -bound, bound)
        b = jax.random.uniform(kb, (fan_out,), jnp.float32, -bound, bound)
        params.append((w, b))
    return params


def dqn_reference(x, params):
    """Pure-JAX reference mirroring the kernel's precision (bf16 dot/residual, f32 acc)."""
    bf16 = jnp.bfloat16
    f32 = jnp.float32
    dot = functools.partial(jnp.dot, preferred_element_type=f32)
    ws = [w.astype(bf16) for w, _ in params]
    bs = [b.astype(f32) for _, b in params]
    h1 = jnp.maximum(dot(x.astype(bf16), ws[0]) + bs[0], 0.0).astype(bf16)
    h2 = jnp.maximum(dot(h1, ws[1]) + bs[1] + h1.astype(f32), 0.0).astype(bf16)
    h3 = jnp.maximum(dot(h2, ws[2]) + bs[2], 0.0).astype(bf16)
    h4 = jnp.maximum(dot(h3, ws[3]) + bs[3] + h3.astype(f32), 0.0).astype(bf16)
    h5 = jnp.maximum(dot(h4, ws[4]) + bs[4], 0.0).astype(bf16)
    return dot(h5, ws[5]) + bs[5]


if __name__ == "__main__":
    key = jax.random.PRNGKey(0)
    k_x, k_p = jax.random.split(key)

    B = 16
    n_observations = 8
    n_actions = 4

    x = jax.random.normal(k_x, (B, n_observations), dtype=jnp.float32)
    params = init_params(k_p, n_observations, n_actions)

    out = jax.block_until_ready(dqn_forward(x, params))

    ref = dqn_reference(x, params)
    assert out.shape == (B, n_actions), out.shape
    assert jnp.allclose(out, ref, atol=2e-3, rtol=2e-3), \
        f"max err {jnp.max(jnp.abs(out - ref))}"

    print("KERNEL_OK")
</pallas_src>

<mosaic_0001>
module attributes {stable_mosaic.version = 11 : i64} {
  func.func @kernel(%arg0: i32, %arg1: memref<8x8xf32, #tpu.memory_space<vmem>>, %arg2: memref<784x512xbf16, #tpu.memory_space<vmem>>, %arg3: memref<8x512xf32, #tpu.memory_space<vmem>>, %arg4: memref<8x8xf32, #tpu.memory_space<vmem>>) attributes {dimension_semantics = [#tpu.dimension_semantics<parallel>], iteration_bounds = array<i64: 2>, scalar_prefetch = 0 : i64, scratch_operands = 0 : i64, tpu.core_type = #tpu.core_type<tc>, window_params = [{transform_indices = @transform_0, window_bounds = array<i64: 8, 8>}, {pipeline_mode = #tpu.pipeline_mode<synchronous>, transform_indices = @transform_1, window_bounds = array<i64: 784, 512>}, {pipeline_mode = #tpu.pipeline_mode<synchronous>, transform_indices = @transform_2, window_bounds = array<i64: 8, 512>}, {transform_indices = @transform_3, window_bounds = array<i64: 8, 8>}]} {
    %c0 = arith.constant 0 : index
    %c0_0 = arith.constant 0 : index
    %0 = vector.load %arg1[%c0, %c0_0] : memref<8x8xf32, #tpu.memory_space<vmem>>, vector<8x8xf32>
    %1 = arith.truncf %0 : vector<8x8xf32> to vector<8x8xbf16>
    %c0_1 = arith.constant 0 : index
    %c0_2 = arith.constant 0 : index
    %2 = vector.load %arg2[%c0_1, %c0_2] : memref<784x512xbf16, #tpu.memory_space<vmem>>, vector<8x128xbf16>
    %c8 = arith.constant 8 : index
    %c0_3 = arith.constant 0 : index
    %3 = vector.load %arg2[%c8, %c0_3] : memref<784x512xbf16, #tpu.memory_space<vmem>>, vector<8x512xbf16>
    %c16 = arith.constant 16 : index
    %c0_4 = arith.constant 0 : index
    %4 = vector.load %arg2[%c16, %c0_4] : memref<784x512xbf16, #tpu.memory_space<vmem>>, vector<128x128xbf16>
    %c144 = arith.constant 144 : index
    %c0_5 = arith.constant 0 : index
    %5 = vector.load %arg2[%c144, %c0_5] : memref<784x512xbf16, #tpu.memory_space<vmem>>, vector<128x256xbf16>
    %c272 = arith.constant 272 : index
    %c0_6 = arith.constant 0 : index
    %6 = vector.load %arg2[%c272, %c0_6] : memref<784x512xbf16, #tpu.memory_space<vmem>>, vector<256x256xbf16>
    %c528 = arith.constant 528 : index
    %c0_7 = arith.constant 0 : index
    %7 = vector.load %arg2[%c528, %c0_7] : memref<784x512xbf16, #tpu.memory_space<vmem>>, vector<256x512xbf16>
    %c0_8 = arith.constant 0 : index
    %c0_9 = arith.constant 0 : index
    %8 = vector.load %arg3[%c0_8, %c0_9] : memref<8x512xf32, #tpu.memory_space<vmem>>, vector<1x128xf32>
    %c1 = arith.constant 1 : index
    %c0_10 = arith.constant 0 : index
    %9 = vector.load %arg3[%c1, %c0_10] : memref<8x512xf32, #tpu.memory_space<vmem>>, vector<1x128xf32>
    %c2 = arith.constant 2 : index
    %c0_11 = arith.constant 0 : index
    %10 = vector.load %arg3[%c2, %c0_11] : memref<8x512xf32, #tpu.memory_space<vmem>>, vector<1x256xf32>
    %c3 = arith.constant 3 : index
    %c0_12 = arith.constant 0 : index
    %11 = vector.load %arg3[%c3, %c0_12] : memref<8x512xf32, #tpu.memory_space<vmem>>, vector<1x256xf32>
    %c4 = arith.constant 4 : index
    %c0_13 = arith.constant 0 : index
    %12 = vector.load %arg3[%c4, %c0_13] : memref<8x512xf32, #tpu.memory_space<vmem>>, vector<1x512xf32>
    %c5 = arith.constant 5 : index
    %c0_14 = arith.constant 0 : index
    %13 = vector.load %arg3[%c5, %c0_14] : memref<8x512xf32, #tpu.memory_space<vmem>>, vector<1x8xf32>
    %cst = arith.constant dense<0.000000e+00> : vector<8x128xf32>
    %14 = tpu.matmul %1, %2, %cst {dimension_numbers = #tpu.dot_dimension_numbers<[1], [0], [0], [1], [0, 0, 1, 1], [], []>} : vector<8x8xbf16>, vector<8x128xbf16>, vector<8x128xf32> -> vector<8x128xf32>
    %15 = vector.broadcast %8 : vector<1x128xf32> to vector<8x128xf32>
    %16 = arith.addf %14, %15 : vector<8x128xf32>
    %cst_15 = arith.constant 0.000000e+00 : f32
    %17 = vector.broadcast %cst_15 : f32 to vector<8x128xf32>
    %18 = arith.maximumf %16, %17 : vector<8x128xf32>
    %19 = arith.truncf %18 : vector<8x128xf32> to vector<8x128xbf16>
    %cst_16 = arith.constant dense<0.000000e+00> : vector<8x128xf32>
    %20 = tpu.matmul %19, %4, %cst_16 {dimension_numbers = #tpu.dot_dimension_numbers<[1], [0], [0], [1], [0, 0, 1, 1], [], []>} : vector<8x128xbf16>, vector<128x128xbf16>, vector<8x128xf32> -> vector<8x128xf32>
    %21 = vector.broadcast %9 : vector<1x128xf32> to vector<8x128xf32>
    %22 = arith.addf %20, %21 : vector<8x128xf32>
    %23 = arith.extf %19 : vector<8x128xbf16> to vector<8x128xf32>
    %24 = arith.addf %22, %23 : vector<8x128xf32>
    %cst_17 = arith.constant 0.000000e+00 : f32
    %25 = vector.broadcast %cst_17 : f32 to vector<8x128xf32>
    %26 = arith.maximumf %24, %25 : vector<8x128xf32>
    %27 = arith.truncf %26 : vector<8x128xf32> to vector<8x128xbf16>
    %cst_18 = arith.constant dense<0.000000e+00> : vector<8x256xf32>
    %28 = tpu.matmul %27, %5, %cst_18 {dimension_numbers = #tpu.dot_dimension_numbers<[1], [0], [0], [1], [0, 0, 1, 1], [], []>} : vector<8x128xbf16>, vector<128x256xbf16>, vector<8x256xf32> -> vector<8x256xf32>
    %29 = vector.broadcast %10 : vector<1x256xf32> to vector<8x256xf32>
    %30 = arith.addf %28, %29 : vector<8x256xf32>
    %cst_19 = arith.constant 0.000000e+00 : f32
    %31 = vector.broadcast %cst_19 : f32 to vector<8x256xf32>
    %32 = arith.maximumf %30, %31 : vector<8x256xf32>
    %33 = arith.truncf %32 : vector<8x256xf32> to vector<8x256xbf16>
    %cst_20 = arith.constant dense<0.000000e+00> : vector<8x256xf32>
    %34 = tpu.matmul %33, %6, %cst_20 {dimension_numbers = #tpu.dot_dimension_numbers<[1], [0], [0], [1], [0, 0, 1, 1], [], []>} : vector<8x256xbf16>, vector<256x256xbf16>, vector<8x256xf32> -> vector<8x256xf32>
    %35 = vector.broadcast %11 : vector<1x256xf32> to vector<8x256xf32>
    %36 = arith.addf %34, %35 : vector<8x256xf32>
    %37 = arith.extf %33 : vector<8x256xbf16> to vector<8x256xf32>
    %38 = arith.addf %36, %37 : vector<8x256xf32>
    %cst_21 = arith.constant 0.000000e+00 : f32
    %39 = vector.broadcast %cst_21 : f32 to vector<8x256xf32>
    %40 = arith.maximumf %38, %39 : vector<8x256xf32>
    %41 = arith.truncf %40 : vector<8x256xf32> to vector<8x256xbf16>
    %cst_22 = arith.constant dense<0.000000e+00> : vector<8x512xf32>
    %42 = tpu.matmul %41, %7, %cst_22 {dimension_numbers = #tpu.dot_dimension_numbers<[1], [0], [0], [1], [0, 0, 1, 1], [], []>} : vector<8x256xbf16>, vector<256x512xbf16>, vector<8x512xf32> -> vector<8x512xf32>
    %43 = vector.broadcast %12 : vector<1x512xf32> to vector<8x512xf32>
    %44 = arith.addf %42, %43 : vector<8x512xf32>
    %cst_23 = arith.constant 0.000000e+00 : f32
    %45 = vector.broadcast %cst_23 : f32 to vector<8x512xf32>
    %46 = arith.maximumf %44, %45 : vector<8x512xf32>
    %47 = arith.truncf %46 : vector<8x512xf32> to vector<8x512xbf16>
    %cst_24 = arith.constant dense<0.000000e+00> : vector<8x8xf32>
    %48 = tpu.matmul %47, %3, %cst_24 {dimension_numbers = #tpu.dot_dimension_numbers<[1], [1], [0], [0], [0, 0, 1, 0], [], []>} : vector<8x512xbf16>, vector<8x512xbf16>, vector<8x8xf32> -> vector<8x8xf32>
    %49 = vector.broadcast %13 : vector<1x8xf32> to vector<8x8xf32>
    %50 = arith.addf %48, %49 : vector<8x8xf32>
    %c0_25 = arith.constant 0 : index
    %c0_26 = arith.constant 0 : index
    %51 = vector.load %arg4[%c0_25, %c0_26] : memref<8x8xf32, #tpu.memory_space<vmem>>, vector<8x8xf32>
    tpu.vector_store %arg4[%c0_25, %c0_26], %50 {strides = array<i32>} : memref<8x8xf32, #tpu.memory_space<vmem>>, vector<8x8xf32>,
    return
  }
  func.func @transform_0(%arg0: i32) -> (i32, i32) {
    %c0_i32 = arith.constant 0 : i32
    %c0_i32_0 = arith.constant 0 : i32
    return %arg0, %c0_i32 : i32, i32
  }
  func.func @transform_1(%arg0: i32) -> (i32, i32) {
    %c0_i32 = arith.constant 0 : i32
    %c0_i32_0 = arith.constant 0 : i32
    %c0_i32_1 = arith.constant 0 : i32
    return %c0_i32, %c0_i32_0 : i32, i32
  }
  func.func @transform_2(%arg0: i32) -> (i32, i32) {
    %c0_i32 = arith.constant 0 : i32
    %c0_i32_0 = arith.constant 0 : i32
    %c0_i32_1 = arith.constant 0 : i32
    return %c0_i32, %c0_i32_0 : i32, i32
  }
  func.func @transform_3(%arg0: i32) -> (i32, i32) {
    %c0_i32 = arith.constant 0 : i32
    %c0_i32_0 = arith.constant 0 : i32
    return %arg0, %c0_i32 : i32, i32
  }
}

</mosaic_0001>

<llo_original>
// kernel: tpu_custom_call.1
$region0: #{tpu_custom_call.1}
  #allocation0 [shape = 'u32[]', space=smem, size = 0x4, offset = 0x4, fixed_abs, tag = 'smem constant byte address 0x4 - core index']
  #allocation1 [shape = 'u32[144,128]{1,0:T(1,128)}', space=vmem, size = 0x12000, scoped, tag = 'internal scratch']
  %s0 = inlined_call_operand.vmem [shape: f32[16,8], index: 0, kind: input, shape index: {}]
  %s1 = inlined_call_operand.hbm [shape: bf16[784,512], index: 1, kind: input, shape index: {}]
  %s2 = inlined_call_operand.hbm [shape: f32[8,512], index: 2, kind: input, shape index: {}]
  %s3 = inlined_call_operand.vmem [shape: f32[16,8], index: 3, kind: output, shape index: {}]
  %s4 = sld [smem:[#allocation0]]
  $region53: #{tpu_custom_call.1} parent=0
    _
  %s6 = ssub.s32 1, %s4
  %s7 = scalar_select 0, %s6, %s4
  $region1: #{tpu_custom_call.1} parent=0
    #allocation2 [shape = 'u8[802816]{0}', space=vmem, size = 0xc4000, scoped, tag = 'input window, operand 1, single buffered']
    #allocation3 [shape = 's32[2]{0}', space=sflag, size = 0x8, scoped, tag = 'scoped memory for tpu_custom_call.1']
    #allocation4 [shape = 'u8[16384]{0}', space=vmem, size = 0x4000, scoped, tag = 'input window, operand 2, single buffered']
    #allocation5 [shape = 's32[1]{0}', space=sflag, size = 0x4, scoped, tag = 'scoped memory for tpu_custom_call.1']
    %8 = vsyncpa [#allocation3], 0
    %9 = vsyncpa [#allocation5], 0
    loop: start=0, step=1, limit=4
    $region2: #{tpu_custom_call.1} parent=1 // loop_pre_header
      _
    $region3: #{tpu_custom_call.1} parent=1 // loop_header
      %s11 = sphi 0, %s15
      %p12 = scmp.ge.s32.totalorder %s11, 4
      %s21 = sphi 0, %s23
      %s24 = sphi 0, %s21
      %s25 = sphi 0, %s24
      %s41 = sphi 0, %s25
      %s45 = sphi 0, %s45
      %s47 = sphi 0, %s45
      %s48 = sphi 0, %s47
      %s62 = sphi 0, %s48
      %s66 = sphi 0, %s66
      %s68 = sphi 0, %s66
      %s69 = sphi 0, %s68
      %s83 = sphi 0, %s69
      %s89 = sphi 0, %s91
      %s92 = sphi 0, %s89
      %s93 = sphi 0, %s92
      %s109 = sphi 0, %s93
    $region4: #{tpu_custom_call.1} parent=1 // loop_header_branch
      %14 = sbr.rel (%p12) target = $region8
    $region5: #{tpu_custom_call.1} parent=1 // loop_body
      %s16 = ssub.s32 %s11, 1
      %s17 = ssub.s32 %s11, 2
      %s18 = sadd.s32 %s11, 1
      %s19 = ssub.s32 %s11, %s18
      %p20 = scmp.eq.s32.totalorder %s19, 0
      %s22 = sadd.s32 %s21, 1
      %s23 = scalar_select %p20, %s21, %s22
      %p26 = pneg %p20
      %p27 = scmp.eq.s32.totalorder %s11, 1
      %p28 = por %p26, %p27
      %p29 = scmp.ne.s32.totalorder %s21, %s24
      %p30 = scmp.eq.s32.totalorder %s11, 0
      %p31 = por %p29, %p30
      %p32 = scmp.ne.s32.totalorder %s21, %s24
      %p33 = scmp.eq.s32.totalorder %s16, 1
      %p34 = por %p32, %p33
      %p35 = scmp.ne.s32.totalorder %s24, %s25
      %p36 = scmp.eq.s32.totalorder %s16, 0
      %p37 = por %p35, %p36
      %p38 = scmp.ne.s32.totalorder %s24, %s25
      %p39 = scmp.eq.s32.totalorder %s17, 1
      %p40 = por %p38, %p39
      %p42 = scmp.ne.s32.totalorder %s25, %s41
      %p43 = scmp.eq.s32.totalorder %s17, 0
      %p44 = por %p42, %p43
      %s46 = sadd.s32 %s45, 1
      %p49 = scmp.eq.s32.totalorder %s11, 1
      %p50 = scmp.ne.s32.totalorder %s45, %s47
      %p51 = scmp.eq.s32.totalorder %s11, 0
      %p52 = por %p50, %p51
      %p53 = scmp.ne.s32.totalorder %s45, %s47
      %p54 = scmp.eq.s32.totalorder %s16, 1
      %p55 = por %p53, %p54
      %p56 = scmp.ne.s32.totalorder %s47, %s48
      %p57 = scmp.eq.s32.totalorder %s16, 0
      %p58 = por %p56, %p57
      %p59 = scmp.ne.s32.totalorder %s47, %s48
      %p60 = scmp.eq.s32.totalorder %s17, 1
      %p61 = por %p59, %p60
      %p63 = scmp.ne.s32.totalorder %s48, %s62
      %p64 = scmp.eq.s32.totalorder %s17, 0
      %p65 = por %p63, %p64
      %s67 = sadd.s32 %s66, 1
      %p70 = scmp.eq.s32.totalorder %s11, 1
      %p71 = scmp.ne.s32.totalorder %s66, %s68
      %p72 = scmp.eq.s32.totalorder %s11, 0
      %p73 = por %p71, %p72
      %p74 = scmp.ne.s32.totalorder %s66, %s68
      %p75 = scmp.eq.s32.totalorder %s16, 1
      %p76 = por %p74, %p75
      %p77 = scmp.ne.s32.totalorder %s68, %s69
      %p78 = scmp.eq.s32.totalorder %s16, 0
      %p79 = por %p77, %p78
      %p80 = scmp.ne.s32.totalorder %s68, %s69
      %p81 = scmp.eq.s32.totalorder %s17, 1
      %p82 = por %p80, %p81
      %p84 = scmp.ne.s32.totalorder %s69, %s83
      %p85 = scmp.eq.s32.totalorder %s17, 0
      %p86 = por %p84, %p85
      %s87 = ssub.s32 %s11, %s18
      %p88 = scmp.eq.s32.totalorder %s87, 0
      %s90 = sadd.s32 %s89, 1
      %s91 = scalar_select %p88, %s89, %s90
      %p94 = pneg %p88
      %p95 = scmp.eq.s32.totalorder %s11, 1
      %p96 = por %p94, %p95
      %p97 = scmp.ne.s32.totalorder %s89, %s92
      %p98 = scmp.eq.s32.totalorder %s11, 0
      %p99 = por %p97, %p98
      %p100 = scmp.ne.s32.totalorder %s89, %s92
      %p101 = scmp.eq.s32.totalorder %s16, 1
      %p102 = por %p100, %p101
      %p103 = scmp.ne.s32.totalorder %s92, %s93
      %p104 = scmp.eq.s32.totalorder %s16, 0
      %p105 = por %p103, %p104
      %p106 = scmp.ne.s32.totalorder %s92, %s93
      %p107 = scmp.eq.s32.totalorder %s17, 1
      %p108 = por %p106, %p107
      %p110 = scmp.ne.s32.totalorder %s93, %s109
      %p111 = scmp.eq.s32.totalorder %s17, 0
      %p112 = por %p110, %p111
      %p113 = scmp.le.s32.totalorder 1, %s11
      %p114 = scmp.lt.s32.totalorder %s11, 3
      %p115 = pnand %p113, %p114
      %p116 = pneg %p115
      // Predicated region
      $region9: #{tpu_custom_call.1} parent=5 // pred_check
        _
      $region10: #{tpu_custom_call.1} parent=5 // pred_check_branch
        %118 = sbr.rel (%p115) target = $region12
      $region11: #{tpu_custom_call.1} parent=5 // pred_region
        %s119 = ssub.s32 %s11, 1
        // Predicated region
        $region13: #{tpu_custom_call.1} parent=11 // pred_check
          %p120 = pneg %p58
        $region14: #{tpu_custom_call.1} parent=11 // pred_check_branch
          %122 = sbr.rel (%p120) target = $region16
        $region15: #{tpu_custom_call.1} parent=11 // pred_region
          %s124 = ssub.s32 25088, 25088
          %125 = vsyncadd [#allocation3], %s124
          %s126 = sshll.u32 [#allocation2], 4
          %s127 = int_to_ptr.vmem [resolvable:$true] %s126
          %132 = dma.hbm_to_vmem [thread:$0]  %s1, 25088, %s127, [#allocation3], 256, 256, 16
        $region16: #{tpu_custom_call.1} parent=11 // pred_fallthru
          _
        // Predicated region
        $region17: #{tpu_custom_call.1} parent=11 // pred_check
          %p133 = pneg %p79
        $region18: #{tpu_custom_call.1} parent=11 // pred_check_branch
          %135 = sbr.rel (%p133) target = $region20
        $region19: #{tpu_custom_call.1} parent=11 // pred_region
          %s137 = ssub.s32 512, 512
          %138 = vsyncadd [#allocation5], %s137
          %s140 = sshll.u32 [#allocation4], 4
          %s141 = int_to_ptr.vmem [resolvable:$true] %s140
          %143 = dma.hbm_to_vmem [thread:$0]  %s2, 512, %s141, [#allocation5]
        $region20: #{tpu_custom_call.1} parent=11 // pred_fallthru
          _
      $region12: #{tpu_custom_call.1} parent=5 // pred_fallthru
        _
      %p144 = scmp.lt.s32.totalorder %s11, 2
      // Predicated region
      $region21: #{tpu_custom_call.1} parent=5 // pred_check
        %p145 = pneg %p144
      $region22: #{tpu_custom_call.1} parent=5 // pred_check_branch
        %147 = sbr.rel (%p145) target = $region24
      $region23: #{tpu_custom_call.1} parent=5 // pred_region
        // Predicated region
        $region25: #{tpu_custom_call.1} parent=23 // pred_check
          %p148 = pneg %p31
        $region26: #{tpu_custom_call.1} parent=23 // pred_check_branch
          %150 = sbr.rel (%p148) target = $region28
        $region27: #{tpu_custom_call.1} parent=23 // pred_region
          %p151 = scmp.lt.s32.totalorder %s11, 1
          %s152 = scalar_select %p151, %s11, 1
          %s153 = smul.addr %s152, 8
          %s154 = scalar_lea.vmem %s0, %s153
        $region28: #{tpu_custom_call.1} parent=23 // pred_fallthru
          _
      $region24: #{tpu_custom_call.1} parent=5 // pred_fallthru
        _
      %p155 = scmp.le.s32.totalorder 1, %s11
      %p156 = scmp.lt.s32.totalorder %s11, 3
      %p157 = pnand %p155, %p156
      %p158 = pneg %p157
      // Predicated region
      $region29: #{tpu_custom_call.1} parent=5 // pred_check
        _
      $region30: #{tpu_custom_call.1} parent=5 // pred_check_branch
        %160 = sbr.rel (%p157) target = $region32
      $region31: #{tpu_custom_call.1} parent=5 // pred_region
        %s161 = ssub.s32 %s11, 1
        // Predicated region
        $region33: #{tpu_custom_call.1} parent=31 // pred_check
          %p162 = pneg %p58
        $region34: #{tpu_custom_call.1} parent=31 // pred_check_branch
          %164 = sbr.rel (%p162) target = $region36
        $region35: #{tpu_custom_call.1} parent=31 // pred_region
          %165 = dma.done [#allocation3], 25088
        $region36: #{tpu_custom_call.1} parent=31 // pred_fallthru
          _
        // Predicated region
        $region37: #{tpu_custom_call.1} parent=31 // pred_check
          %p166 = pneg %p79
        $region38: #{tpu_custom_call.1} parent=31 // pred_check_branch
          %168 = sbr.rel (%p166) target = $region40
        $region39: #{tpu_custom_call.1} parent=31 // pred_region
          %169 = dma.done [#allocation5], 512
        $region40: #{tpu_custom_call.1} parent=31 // pred_fallthru
          _
        %p170 = scmp.lt.s32.totalorder %s16, 1
        %s171 = scalar_select %p170, %s16, 1
        %s172 = smul.addr %s171, 8
        %s173 = scalar_lea.vmem %s0, %s172
        %p174 = pneg %p37
        %p175 = pneg %p34
        %p176 = pneg %p58
        %p177 = pneg %p55
        %p178 = pneg %p79
        %p179 = pneg %p76
        %p180 = pneg %p105
        %p181 = pneg %p102
        %p182 = scmp.lt.s32.totalorder %s16, 1
        %s183 = scalar_select %p182, %s16, 1
        %s184 = smul.addr %s183, 8
        %s185 = scalar_lea.vmem %s3, %s184
        %p186 = scmp.lt.s32.totalorder %s16, 1
        %s187 = scalar_select %p186, %s16, 1
        %s188 = smul.addr %s187, 8
        %s189 = scalar_lea.vmem %s0, %s188
        %p190 = scmp.lt.s32.totalorder %s16, 1
        %s191 = scalar_select %p190, %s16, 1
        %s192 = smul.addr %s191, 8
        %s193 = scalar_lea.vmem %s3, %s192
        %v195 = vld [vmem:[%s189] sm:$0xff]
        %v196 = vpack.c.bf16 %v195, %v195
        %v197 = vld [vmem:[#allocation2] sm:$0xf]
        %v198 = vld [vmem:[#allocation2 + $0x10] sm:$0xff]
        %v199 = vld [vmem:[#allocation2 + $0x18] sm:$0xff]
        %v200 = vld [vmem:[#allocation2 + $0x20] sm:$0xf]
        %v201 = vld [vmem:[#allocation2 + $0x30] sm:$0xf]
        %v202 = vld [vmem:[#allocation2 + $0x40] sm:$0xf]
        %v203 = vld [vmem:[#allocation2 + $0x50] sm:$0xf]
        %v204 = vld [vmem:[#allocation2 + $0x60] sm:$0xf]
        %v205 = vld [vmem:[#allocation2 + $0x70] sm:$0xf]
        %v206 = vld [vmem:[#allocation2 + $0x80] sm:$0xf]
        %v207 = vld [vmem:[#allocation2 + $0x90] sm:$0xf]
        %v208 = vld [vmem:[#allocation2 + $0xa0] sm:$0xf]
        %v209 = vld [vmem:[#allocation2 + $0xb0] sm:$0xf]
        %v210 = vld [vmem:[#allocation2 + $0xc0] sm:$0xf]
        %v211 = vld [vmem:[#allocation2 + $0xd0] sm:$0xf]
        %v212 = vld [vmem:[#allocation2 + $0xe0] sm:$0xf]
        %v213 = vld [vmem:[#allocation2 + $0xf0] sm:$0xf]
        %v214 = vld [vmem:[#allocation2 + $0x100] sm:$0xf]
        %v215 = vld [vmem:[#allocation2 + $0x110] sm:$0xf]
        %v216 = vld [vmem:[#allocation2 + $0x120] sm:$0xff]
        %v217 = vld [vmem:[#allocation2 + $0x130] sm:$0xff]
        %v218 = vld [vmem:[#allocation2 + $0x140] sm:$0xff]
        %v219 = vld [vmem:[#allocation2 + $0x150] sm:$0xff]
        %v220 = vld [vmem:[#allocation2 + $0x160] sm:$0xff]
        %v221 = vld [vmem:[#allocation2 + $0x170] sm:$0xff]
        %v222 = vld [vmem:[#allocation2 + $0x180] sm:$0xff]
        %v223 = vld [vmem:[#allocation2 + $0x190] sm:$0xff]
        %v224 = vld [vmem:[#allocation2 + $0x1a0] sm:$0xff]
        %v225 = vld [vmem:[#allocation2 + $0x1b0] sm:$0xff]
        %v226 = vld [vmem:[#allocation2 + $0x1c0] sm:$0xff]
        %v227 = vld [vmem:[#allocation2 + $0x1d0] sm:$0xff]
        %v228 = vld [vmem:[#allocation2 + $0x1e0] sm:$0xff]
        %v229 = vld [vmem:[#allocation2 + $0x1f0] sm:$0xff]
        %v230 = vld [vmem:[#allocation2 + $0x200] sm:$0xff]
        %v231 = vld [vmem:[#allocation2 + $0x210] sm:$0xff]
        %v232 = vld [vmem:[#allocation2 + $0x220] sm:$0xff]
        %v233 = vld [vmem:[#allocation2 + $0x230] sm:$0xff]
        %v234 = vld [vmem:[#allocation2 + $0x240] sm:$0xff]
        %v235 = vld [vmem:[#allocation2 + $0x250] sm:$0xff]
        %v236 = vld [vmem:[#allocation2 + $0x260] sm:$0xff]
        %v237 = vld [vmem:[#allocation2 + $0x270] sm:$0xff]
        %v238 = vld [vmem:[#allocation2 + $0x280] sm:$0xff]
        %v239 = vld [vmem:[#allocation2 + $0x290] sm:$0xff]
        %v240 = vld [vmem:[#allocation2 + $0x2a0] sm:$0xff]
        %v241 = vld [vmem:[#allocation2 + $0x2b0] sm:$0xff]
        %v242 = vld [vmem:[#allocation2 + $0x2c0] sm:$0xff]
        %v243 = vld [vmem:[#allocation2 + $0x2d0] sm:$0xff]
        %v244 = vld [vmem:[#allocation2 + $0x2e0] sm:$0xff]
        %v245 = vld [vmem:[#allocation2 + $0x2f0] sm:$0xff]
        %v246 = vld [vmem:[#allocation2 + $0x300] sm:$0xff]
        %v247 = vld [vmem:[#allocation2 + $0x310] sm:$0xff]
        %v248 = vld [vmem:[#allocation2 + $0x320] sm:$0xff]
        %v249 = vld [vmem:[#allocation2 + $0x330] sm:$0xff]
        %v250 = vld [vmem:[#allocation2 + $0x340] sm:$0xff]
        %v251 = vld [vmem:[#allocation2 + $0x350] sm:$0xff]
        %v252 = vld [vmem:[#allocation2 + $0x360] sm:$0xff]
        %v253 = vld [vmem:[#allocation2 + $0x370] sm:$0xff]
        %v254 = vld [vmem:[#allocation2 + $0x380] sm:$0xff]
        %v255 = vld [vmem:[#allocation2 + $0x390] sm:$0xff]
        %v256 = vld [vmem:[#allocation2 + $0x3a0] sm:$0xff]
        %v257 = vld [vmem:[#allocation2 + $0x3b0] sm:$0xff]
        %v258 = vld [vmem:[#allocation2 + $0x3c0] sm:$0xff]
        %v259 = vld [vmem:[#allocation2 + $0x3d0] sm:$0xff]
        %v260 = vld [vmem:[#allocation2 + $0x3e0] sm:$0xff]
        %v261 = vld [vmem:[#allocation2 + $0x3f0] sm:$0xff]
        %v262 = vld [vmem:[#allocation2 + $0x400] sm:$0xff]
        %v263 = vld [vmem:[#allocation2 + $0x410] sm:$0xff]
        %v264 = vld [vmem:[#allocation2 + $0x420] sm:$0xff]
        %v265 = vld [vmem:[#allocation2 + $0x428] sm:$0xff]
        %v266 = vld [vmem:[#allocation2 + $0x430] sm:$0xff]
        %v267 = vld [vmem:[#allocation2 + $0x438] sm:$0xff]
        %v268 = vld [vmem:[#allocation2 + $0x440] sm:$0xff]
        %v269 = vld [vmem:[#allocation2 + $0x448] sm:$0xff]
        %v270 = vld [vmem:[#allocation2 + $0x450] sm:$0xff]
        %v271 = vld [vmem:[#allocation2 + $0x458] sm:$0xff]
        %v272 = vld [vmem:[#allocation2 + $0x460] sm:$0xff]
        %v273 = vld [vmem:[#allocation2 + $0x468] sm:$0xff]
        %v274 = vld [vmem:[#allocation2 + $0x470] sm:$0xff]
        %v275 = vld [vmem:[#allocation2 + $0x478] sm:$0xff]
        %v276 = vld [vmem:[#allocation2 + $0x480] sm:$0xff]
        %v277 = vld [vmem:[#allocation2 + $0x488] sm:$0xff]
        %v278 = vld [vmem:[#allocation2 + $0x490] sm:$0xff]
        %v279 = vld [vmem:[#allocation2 + $0x498] sm:$0xff]
        %v280 = vld [vmem:[#allocation2 + $0x4a0] sm:$0xff]
        %v281 = vld [vmem:[#allocation2 + $0x4a8] sm:$0xff]
        %v282 = vld [vmem:[#allocation2 + $0x4b0] sm:$0xff]
        %v283 = vld [vmem:[#allocation2 + $0x4b8] sm:$0xff]
        %v284 = vld [vmem:[#allocation2 + $0x4c0] sm:$0xff]
        %v285 = vld [vmem:[#allocation2 + $0x4c8] sm:$0xff]
        %v286 = vld [vmem:[#allocation2 + $0x4d0] sm:$0xff]
        %v287 = vld [vmem:[#allocation2 + $0x4d8] sm:$0xff]
        %v288 = vld [vmem:[#allocation2 + $0x4e0] sm:$0xff]
        %v289 = vld [vmem:[#allocation2 + $0x4e8] sm:$0xff]
        %v290 = vld [vmem:[#allocation2 + $0x4f0] sm:$0xff]
        %v291 = vld [vmem:[#allocation2 + $0x4f8] sm:$0xff]
        %v292 = vld [vmem:[#allocation2 + $0x500] sm:$0xff]
        %v293 = vld [vmem:[#allocation2 + $0x508] sm:$0xff]
        %v294 = vld [vmem:[#allocation2 + $0x510] sm:$0xff]
        %v295 = vld [vmem:[#allocation2 + $0x518] sm:$0xff]
        %v296 = vld [vmem:[#allocation2 + $0x520] sm:$0xff]
        %v297 = vld [vmem:[#allocation2 + $0x528] sm:$0xff]
        %v298 = vld [vmem:[#allocation2 + $0x530] sm:$0xff]
        %v299 = vld [vmem:[#allocation2 + $0x538] sm:$0xff]
        %v300 = vld [vmem:[#allocation2 + $0x540] sm:$0xff]
        %v301 = vld [vmem:[#allocation2 + $0x548] sm:$0xff]
        %v302 = vld [vmem:[#allocation2 + $0x550] sm:$0xff]
        %v303 = vld [vmem:[#allocation2 + $0x558] sm:$0xff]
        %v304 = vld [vmem:[#allocation2 + $0x560] sm:$0xff]
        %v305 = vld [vmem:[#allocation2 + $0x568] sm:$0xff]
        %v306 = vld [vmem:[#allocation2 + $0x570] sm:$0xff]
        %v307 = vld [vmem:[#allocation2 + $0x578] sm:$0xff]
        %v308 = vld [vmem:[#allocation2 + $0x580] sm:$0xff]
        %v309 = vld [vmem:[#allocation2 + $0x588] sm:$0xff]
        %v310 = vld [vmem:[#allocation2 + $0x590] sm:$0xff]
        %v311 = vld [vmem:[#allocation2 + $0x598] sm:$0xff]
        %v312 = vld [vmem:[#allocation2 + $0x5a0] sm:$0xff]
        %v313 = vld [vmem:[#allocation2 + $0x5a8] sm:$0xff]
        %v314 = vld [vmem:[#allocation2 + $0x5b0] sm:$0xff]
        %v315 = vld [vmem:[#allocation2 + $0x5b8] sm:$0xff]
        %v316 = vld [vmem:[#allocation2 + $0x5c0] sm:$0xff]
        %v317 = vld [vmem:[#allocation2 + $0x5c8] sm:$0xff]
        %v318 = vld [vmem:[#allocation2 + $0x5d0] sm:$0xff]
        %v319 = vld [vmem:[#allocation2 + $0x5d8] sm:$0xff]
        %v320 = vld [vmem:[#allocation2 + $0x5e0] sm:$0xff]
        %v321 = vld [vmem:[#allocation2 + $0x5e8] sm:$0xff]
        %v322 = vld [vmem:[#allocation2 + $0x5f0] sm:$0xff]
        %v323 = vld [vmem:[#allocation2 + $0x5f8] sm:$0xff]
        %v324 = vld [vmem:[#allocation2 + $0x600] sm:$0xff]
        %v325 = vld [vmem:[#allocation2 + $0x608] sm:$0xff]
        %v326 = vld [vmem:[#allocation2 + $0x610] sm:$0xff]
        %v327 = vld [vmem:[#allocation2 + $0x618] sm:$0xff]
        %v328 = vld [vmem:[#allocation4] ss:$0 sm:$0xff]
        %v329 = vld [vmem:[#allocation4 + $0x1] ss:$0 sm:$0xff]
        %s330 = scalar_lea.vmem [#allocation4], 2
        %v331 = vld [vmem:[%s330] ss:$8 sm:$0x3]
        %s332 = scalar_lea.vmem [#allocation4], 3
        %v333 = vld [vmem:[%s332] ss:$8 sm:$0x3]
        %s334 = scalar_lea.vmem [#allocation4], 4
        %v335 = vld [vmem:[%s334] ss:$8 sm:$0xf]
        %v336 = vld [vmem:[#allocation4 + $0x5] ss:$0 sm:$0xff]
        %vm337 = vcmask 64512
        %v339 = vsel %vm337, %v196, 0
        %vm341 = vcmask 1043456
        %v343 = vsel %vm341, %v197, 0
        %345 = vmatprep.subr.bf16.mxu0 0
        %346 = vmatpush1.bf16.msra.mxu0 0
        %347 = vmatprep.subr.bf16.mxu0 0
        %348 = vmatpush1.bf16.msra.mxu0 0
        %349 = vmatprep.subr.bf16.mxu0 0
        %350 = vmatpush1.bf16.msra.mxu0 0
        %351 = vmatprep.subr.bf16.mxu0 0
        %352 = vmatpush1.bf16.msra.mxu0 0
        %353 = vmatprep.subr.bf16.mxu0 0
        %354 = vmatpush1.bf16.msra.mxu0 0
        %355 = vmatprep.subr.bf16.mxu0 0
        %356 = vmatpush1.bf16.msra.mxu0 0
        %357 = vmatprep.subr.bf16.mxu0 0
        %358 = vmatpush1.bf16.msra.mxu0 0
        %359 = vmatprep.subr.bf16.mxu0 0
        %360 = vmatpush1.bf16.msra.mxu0 %v343
        %361 = vmatprep.subr.bf16.mxu0 0
        %362 = vmatpush2.bf16.msra.mxu0 0
        %363 = vmatprep.subr.bf16.mxu0 0
        %364 = vmatpush2.bf16.msra.mxu0 0
        %365 = vmatprep.subr.bf16.mxu0 0
        %366 = vmatpush2.bf16.msra.mxu0 0
        %367 = vmatprep.subr.bf16.mxu0 0
        %368 = vmatpush2.bf16.msra.mxu0 0
        %369 = vmatprep.subr.bf16.mxu0 0
        %370 = vmatpush2.bf16.msra.mxu0 0
        %371 = vmatprep.subr.bf16.mxu0 0
        %372 = vmatpush2.bf16.msra.mxu0 0
        %373 = vmatprep.subr.bf16.mxu0 0
        %374 = vmatpush2.bf16.msra.mxu0 0
        %375 = vmatprep.subr.bf16.mxu0 0
        %376 = vmatpush2.bf16.msra.mxu0 0
        %377 = vmatprep.mubr.bf16.mxu0 0
        %378 = vmatmul.mubr.bf16.gmra.mxu0 %v339
        %v379 = vpop.f32.mrf.mxu0
        %v380 = vadd.f32 %v328, %v379
        %v381 = vpop.f32.mrf.mxu0
        %v382 = vpop.f32.mrf.mxu0
        %v383 = vpop.f32.mrf.mxu0
        %384 = vdwg.mxu0
        %v385 = vmax.f32 %v380, 0.0
        %v386 = vpack.c.bf16 %v385, %v385
        %v403 = vunpack.c.l.b16 %v200
        %v404 = vunpack.c.l.b16 %v201
        %v405 = vunpack.c.l.b16 %v202
        %v406 = vunpack.c.l.b16 %v203
        %v407 = vunpack.c.l.b16 %v204
        %v408 = vunpack.c.l.b16 %v205
        %v409 = vunpack.c.l.b16 %v206
        %v410 = vunpack.c.l.b16 %v207
        %v411 = vunpack.c.l.b16 %v208
        %v412 = vunpack.c.l.b16 %v209
        %v413 = vunpack.c.l.b16 %v210
        %v414 = vunpack.c.l.b16 %v211
        %v415 = vunpack.c.l.b16 %v212
        %v416 = vunpack.c.l.b16 %v213
        %v417 = vunpack.c.l.b16 %v214
        %v418 = vunpack.c.l.b16 %v215
        %v419 = vpack.c.b16 %v404, %v403
        %v420 = vpack.c.b16 %v406, %v405
        %v421 = vpack.c.b16 %v408, %v407
        %v422 = vpack.c.b16 %v410, %v409
        %v423 = vpack.c.b16 %v412, %v411
        %v424 = vpack.c.b16 %v414, %v413
        %v425 = vpack.c.b16 %v416, %v415
        %v426 = vpack.c.b16 %v418, %v417
        %435 = vmatprep.subr.bf16.mxu0 0
        %436 = vmatpush1.bf16.msra.mxu0 %v426
        %437 = vmatprep.subr.bf16.mxu0 0
        %438 = vmatpush1.bf16.msra.mxu0 %v425
        %439 = vmatprep.subr.bf16.mxu0 0
        %440 = vmatpush1.bf16.msra.mxu0 %v424
        %441 = vmatprep.subr.bf16.mxu0 0
        %442 = vmatpush1.bf16.msra.mxu0 %v423
        %443 = vmatprep.subr.bf16.mxu0 0
        %444 = vmatpush1.bf16.msra.mxu0 %v422
        %445 = vmatprep.subr.bf16.mxu0 0
        %446 = vmatpush1.bf16.msra.mxu0 %v421
        %447 = vmatprep.subr.bf16.mxu0 0
        %448 = vmatpush1.bf16.msra.mxu0 %v420
        %449 = vmatprep.subr.bf16.mxu0 0
        %450 = vmatpush1.bf16.msra.mxu0 %v419
        %451 = vmatprep.subr.bf16.mxu0 0
        %452 = vmatpush2.bf16.msra.mxu0 0
        %453 = vmatprep.subr.bf16.mxu0 0
        %454 = vmatpush2.bf16.msra.mxu0 0
        %455 = vmatprep.subr.bf16.mxu0 0
        %456 = vmatpush2.bf16.msra.mxu0 0
        %457 = vmatprep.subr.bf16.mxu0 0
        %458 = vmatpush2.bf16.msra.mxu0 0
        %459 = vmatprep.subr.bf16.mxu0 0
        %460 = vmatpush2.bf16.msra.mxu0 0
        %461 = vmatprep.subr.bf16.mxu0 0
        %462 = vmatpush2.bf16.msra.mxu0 0
        %463 = vmatprep.subr.bf16.mxu0 0
        %464 = vmatpush2.bf16.msra.mxu0 0
        %465 = vmatprep.subr.bf16.mxu0 0
        %466 = vmatpush2.bf16.msra.mxu0 0
        %467 = vmatprep.mubr.bf16.mxu0 0
        %468 = vmatmul.mubr.bf16.gmra.mxu0 %v386
        %v469 = vpop.f32.mrf.mxu0
        %v470 = vadd.f32 %v329, %v469
        %v471 = vpop.f32.mrf.mxu0
        %v472 = vpop.f32.mrf.mxu0
        %v473 = vpop.f32.mrf.mxu0
        %474 = vdwg.mxu0
        %v475 = vunpack.c.l.bf16 %v386
        %v476 = vadd.f32 %v470, %v475
        %v477 = vmax.f32 %v476, 0.0
        %v478 = vpack.c.bf16 %v477, %v477
        %v480 = vlaneseq
        %v481 = vshrl.u32 %v480, 7
        %v482 = vsub.s32 0, %v481
        %v483 = vrot.slane %v331, %v482
        %v484 = vlaneseq
        %v485 = vshrl.u32 %v484, 7
        %v486 = vsub.s32 1, %v485
        %v487 = vrot.slane %v331, %v486
        %v506 = vunpack.c.l.b16 %v216
        %v507 = vunpack.c.h.b16 %v216
        %v508 = vunpack.c.l.b16 %v217
        %v509 = vunpack.c.h.b16 %v217
        %v510 = vunpack.c.l.b16 %v218
        %v511 = vunpack.c.h.b16 %v218
        %v512 = vunpack.c.l.b16 %v219
        %v513 = vunpack.c.h.b16 %v219
        %v514 = vunpack.c.l.b16 %v220
        %v515 = vunpack.c.h.b16 %v220
        %v516 = vunpack.c.l.b16 %v221
        %v517 = vunpack.c.h.b16 %v221
        %v518 = vunpack.c.l.b16 %v222
        %v519 = vunpack.c.h.b16 %v222
        %v520 = vunpack.c.l.b16 %v223
        %v521 = vunpack.c.h.b16 %v223
        %v522 = vunpack.c.l.b16 %v224
        %v523 = vunpack.c.h.b16 %v224
        %v524 = vunpack.c.l.b16 %v225
        %v525 = vunpack.c.h.b16 %v225
        %v526 = vunpack.c.l.b16 %v226
        %v527 = vunpack.c.h.b16 %v226
        %v528 = vunpack.c.l.b16 %v227
        %v529 = vunpack.c.h.b16 %v227
        %v530 = vunpack.c.l.b16 %v228
        %v531 = vunpack.c.h.b16 %v228
        %v532 = vunpack.c.l.b16 %v229
        %v533 = vunpack.c.h.b16 %v229
        %v534 = vunpack.c.l.b16 %v230
        %v535 = vunpack.c.h.b16 %v230
        %v536 = vunpack.c.l.b16 %v231
        %v537 = vunpack.c.h.b16 %v231
        %v538 = vpack.c.b16 %v508, %v506
        %v539 = vpack.c.b16 %v509, %v507
        %v540 = vpack.c.b16 %v512, %v510
        %v541 = vpack.c.b16 %v513, %v511
        %v542 = vpack.c.b16 %v516, %v514
        %v543 = vpack.c.b16 %v517, %v515
        %v544 = vpack.c.b16 %v520, %v518
        %v545 = vpack.c.b16 %v521, %v519
        %v546 = vpack.c.b16 %v524, %v522
        %v547 = vpack.c.b16 %v525, %v523
        %v548 = vpack.c.b16 %v528, %v526
        %v549 = vpack.c.b16 %v529, %v527
        %v550 = vpack.c.b16 %v532, %v530
        %v551 = vpack.c.b16 %v533, %v531
        %v552 = vpack.c.b16 %v536, %v534
        %v553 = vpack.c.b16 %v537, %v535
        %570 = vmatprep.subr.bf16.mxu0 %v553
        %571 = vmatpush1.bf16.msra.mxu0 %v552
        %572 = vmatprep.subr.bf16.mxu0 %v551
        %573 = vmatpush1.bf16.msra.mxu0 %v550
        %574 = vmatprep.subr.bf16.mxu0 %v549
        %575 = vmatpush1.bf16.msra.mxu0 %v548
        %576 = vmatprep.subr.bf16.mxu0 %v547
        %577 = vmatpush1.bf16.msra.mxu0 %v546
        %578 = vmatprep.subr.bf16.mxu0 %v545
        %579 = vmatpush1.bf16.msra.mxu0 %v544
        %580 = vmatprep.subr.bf16.mxu0 %v543
        %581 = vmatpush1.bf16.msra.mxu0 %v542
        %582 = vmatprep.subr.bf16.mxu0 %v541
        %583 = vmatpush1.bf16.msra.mxu0 %v540
        %584 = vmatprep.subr.bf16.mxu0 %v539
        %585 = vmatpush1.bf16.msra.mxu0 %v538
        %586 = vmatprep.subr.bf16.mxu0 0
        %587 = vmatpush2.bf16.msra.mxu0 0
        %588 = vmatprep.subr.bf16.mxu0 0
        %589 = vmatpush2.bf16.msra.mxu0 0
        %590 = vmatprep.subr.bf16.mxu0 0
        %591 = vmatpush2.bf16.msra.mxu0 0
        %592 = vmatprep.subr.bf16.mxu0 0
        %593 = vmatpush2.bf16.msra.mxu0 0
        %594 = vmatprep.subr.bf16.mxu0 0
        %595 = vmatpush2.bf16.msra.mxu0 0
        %596 = vmatprep.subr.bf16.mxu0 0
        %597 = vmatpush2.bf16.msra.mxu0 0
        %598 = vmatprep.subr.bf16.mxu0 0
        %599 = vmatpush2.bf16.msra.mxu0 0
        %600 = vmatprep.subr.bf16.mxu0 0
        %601 = vmatpush2.bf16.msra.mxu0 0
        %602 = vmatprep.mubr.bf16.mxu0 0
        %603 = vmatmul.mubr.bf16.gmra.mxu0 %v478
        %v604 = vpop.f32.mrf.mxu0
        %v605 = vadd.f32 %v483, %v604
        %v606 = vpop.f32.mrf.mxu0
        %v607 = vadd.f32 %v487, %v606
        %v608 = vpop.f32.mrf.mxu0
        %v609 = vpop.f32.mrf.mxu0
        %610 = vdwg.mxu0
        %v611 = vmax.f32 %v605, 0.0
        %v612 = vmax.f32 %v607, 0.0
        %v613 = vpack.c.bf16 %v611, %v611
        %v614 = vpack.c.bf16 %v612, %v612
        %v616 = vlaneseq
        %v617 = vshrl.u32 %v616, 7
        %v618 = vsub.s32 0, %v617
        %v619 = vrot.slane %v333, %v618
        %v620 = vlaneseq
        %v621 = vshrl.u32 %v620, 7
        %v622 = vsub.s32 1, %v621
        %v623 = vrot.slane %v333, %v622
        %v658 = vunpack.c.l.b16 %v232
        %v659 = vunpack.c.h.b16 %v232
        %v660 = vunpack.c.l.b16 %v233
        %v661 = vunpack.c.h.b16 %v233
        %v662 = vunpack.c.l.b16 %v234
        %v663 = vunpack.c.h.b16 %v234
        %v664 = vunpack.c.l.b16 %v235
        %v665 = vunpack.c.h.b16 %v235
        %v666 = vunpack.c.l.b16 %v236
        %v667 = vunpack.c.h.b16 %v236
        %v668 = vunpack.c.l.b16 %v237
        %v669 = vunpack.c.h.b16 %v237
        %v670 = vunpack.c.l.b16 %v238
        %v671 = vunpack.c.h.b16 %v238
        %v672 = vunpack.c.l.b16 %v239
        %v673 = vunpack.c.h.b16 %v239
        %v674 = vunpack.c.l.b16 %v240
        %v675 = vunpack.c.h.b16 %v240
        %v676 = vunpack.c.l.b16 %v241
        %v677 = vunpack.c.h.b16 %v241
        %v678 = vunpack.c.l.b16 %v242
        %v679 = vunpack.c.h.b16 %v242
        %v680 = vunpack.c.l.b16 %v243
        %v681 = vunpack.c.h.b16 %v243
        %v682 = vunpack.c.l.b16 %v244
        %v683 = vunpack.c.h.b16 %v244
        %v684 = vunpack.c.l.b16 %v245
        %v685 = vunpack.c.h.b16 %v245
        %v686 = vunpack.c.l.b16 %v246
        %v687 = vunpack.c.h.b16 %v246
        %v688 = vunpack.c.l.b16 %v247
        %v689 = vunpack.c.h.b16 %v247
        %v690 = vunpack.c.l.b16 %v248
        %v691 = vunpack.c.h.b16 %v248
        %v692 = vunpack.c.l.b16 %v249
        %v693 = vunpack.c.h.b16 %v249
        %v694 = vunpack.c.l.b16 %v250
        %v695 = vunpack.c.h.b16 %v250
        %v696 = vunpack.c.l.b16 %v251
        %v697 = vunpack.c.h.b16 %v251
        %v698 = vunpack.c.l.b16 %v252
        %v699 = vunpack.c.h.b16 %v252
        %v700 = vunpack.c.l.b16 %v253
        %v701 = vunpack.c.h.b16 %v253
        %v702 = vunpack.c.l.b16 %v254
        %v703 = vunpack.c.h.b16 %v254
        %v704 = vunpack.c.l.b16 %v255
        %v705 = vunpack.c.h.b16 %v255
        %v706 = vunpack.c.l.b16 %v256
        %v707 = vunpack.c.h.b16 %v256
        %v708 = vunpack.c.l.b16 %v257
        %v709 = vunpack.c.h.b16 %v257
        %v710 = vunpack.c.l.b16 %v258
        %v711 = vunpack.c.h.b16 %v258
        %v712 = vunpack.c.l.b16 %v259
        %v713 = vunpack.c.h.b16 %v259
        %v714 = vunpack.c.l.b16 %v260
        %v715 = vunpack.c.h.b16 %v260
        %v716 = vunpack.c.l.b16 %v261
        %v717 = vunpack.c.h.b16 %v261
        %v718 = vunpack.c.l.b16 %v262
        %v719 = vunpack.c.h.b16 %v262
        %v720 = vunpack.c.l.b16 %v263
        %v721 = vunpack.c.h.b16 %v263
        %v722 = vpack.c.b16 %v660, %v658
        %v723 = vpack.c.b16 %v661, %v659
        %v724 = vpack.c.b16 %v664, %v662
        %v725 = vpack.c.b16 %v665, %v663
        %v726 = vpack.c.b16 %v668, %v666
        %v727 = vpack.c.b16 %v669, %v667
        %v728 = vpack.c.b16 %v672, %v670
        %v729 = vpack.c.b16 %v673, %v671
        %v730 = vpack.c.b16 %v676, %v674
        %v731 = vpack.c.b16 %v677, %v675
        %v732 = vpack.c.b16 %v680, %v678
        %v733 = vpack.c.b16 %v681, %v679
        %v734 = vpack.c.b16 %v684, %v682
        %v735 = vpack.c.b16 %v685, %v683
        %v736 = vpack.c.b16 %v688, %v686
        %v737 = vpack.c.b16 %v689, %v687
        %v738 = vpack.c.b16 %v692, %v690
        %v739 = vpack.c.b16 %v693, %v691
        %v740 = vpack.c.b16 %v696, %v694
        %v741 = vpack.c.b16 %v697, %v695
        %v742 = vpack.c.b16 %v700, %v698
        %v743 = vpack.c.b16 %v701, %v699
        %v744 = vpack.c.b16 %v704, %v702
        %v745 = vpack.c.b16 %v705, %v703
        %v746 = vpack.c.b16 %v708, %v706
        %v747 = vpack.c.b16 %v709, %v707
        %v748 = vpack.c.b16 %v712, %v710
        %v749 = vpack.c.b16 %v713, %v711
        %v750 = vpack.c.b16 %v716, %v714
        %v751 = vpack.c.b16 %v717, %v715
        %v752 = vpack.c.b16 %v720, %v718
        %v753 = vpack.c.b16 %v721, %v719
        %786 = vmatprep.subr.bf16.mxu0 %v737
        %787 = vmatpush1.bf16.msra.mxu0 %v736
        %788 = vmatprep.subr.bf16.mxu0 %v735
        %789 = vmatpush1.bf16.msra.mxu0 %v734
        %790 = vmatprep.subr.bf16.mxu0 %v733
        %791 = vmatpush1.bf16.msra.mxu0 %v732
        %792 = vmatprep.subr.bf16.mxu0 %v731
        %793 = vmatpush1.bf16.msra.mxu0 %v730
        %794 = vmatprep.subr.bf16.mxu0 %v729
        %795 = vmatpush1.bf16.msra.mxu0 %v728
        %796 = vmatprep.subr.bf16.mxu0 %v727
        %797 = vmatpush1.bf16.msra.mxu0 %v726
        %798 = vmatprep.subr.bf16.mxu0 %v725
        %799 = vmatpush1.bf16.msra.mxu0 %v724
        %800 = vmatprep.subr.bf16.mxu0 %v723
        %801 = vmatpush1.bf16.msra.mxu0 %v722
        %802 = vmatprep.subr.bf16.mxu0 %v753
        %803 = vmatpush2.bf16.msra.mxu0 %v752
        %804 = vmatprep.subr.bf16.mxu0 %v751
        %805 = vmatpush2.bf16.msra.mxu0 %v750
        %806 = vmatprep.subr.bf16.mxu0 %v749
        %807 = vmatpush2.bf16.msra.mxu0 %v748
        %808 = vmatprep.subr.bf16.mxu0 %v747
        %809 = vmatpush2.bf16.msra.mxu0 %v746
        %810 = vmatprep.subr.bf16.mxu0 %v745
        %811 = vmatpush2.bf16.msra.mxu0 %v744
        %812 = vmatprep.subr.bf16.mxu0 %v743
        %813 = vmatpush2.bf16.msra.mxu0 %v742
        %814 = vmatprep.subr.bf16.mxu0 %v741
        %815 = vmatpush2.bf16.msra.mxu0 %v740
        %816 = vmatprep.subr.bf16.mxu0 %v739
        %817 = vmatpush2.bf16.msra.mxu0 %v738
        %818 = vmatprep.mubr.bf16.mxu0 %v614
        %819 = vmatmul.mubr.bf16.gmra.mxu0 %v613
        %v820 = vpop.f32.mrf.mxu0
        %v821 = vadd.f32 %v619, %v820
        %v822 = vpop.f32.mrf.mxu0
        %v823 = vadd.f32 %v623, %v822
        %v824 = vpop.f32.mrf.mxu0
        %v825 = vpop.f32.mrf.mxu0
        %826 = vdwg.mxu0
        %v827 = vunpack.c.l.bf16 %v613
        %v828 = vunpack.c.l.bf16 %v614
        %v829 = vadd.f32 %v821, %v827
        %v830 = vadd.f32 %v823, %v828
        %v831 = vmax.f32 %v829, 0.0
        %v832 = vmax.f32 %v830, 0.0
        %v833 = vpack.c.bf16 %v831, %v831
        %v834 = vpack.c.bf16 %v832, %v832
        %v836 = vlaneseq
        %v837 = vshrl.u32 %v836, 7
        %v838 = vsub.s32 0, %v837
        %v839 = vrot.slane %v335, %v838
        %v840 = vlaneseq
        %v841 = vshrl.u32 %v840, 7
        %v842 = vsub.s32 1, %v841
        %v843 = vrot.slane %v335, %v842
        %v844 = vlaneseq
        %v845 = vshrl.u32 %v844, 7
        %v846 = vsub.s32 2, %v845
        %v847 = vrot.slane %v335, %v846
        %v848 = vlaneseq
        %v849 = vshrl.u32 %v848, 7
        %v850 = vsub.s32 3, %v849
        %v851 = vrot.slane %v335, %v850
        %v920 = vunpack.c.l.b16 %v264
        %v921 = vunpack.c.h.b16 %v264
        %v922 = vunpack.c.l.b16 %v265
        %v923 = vunpack.c.h.b16 %v265
        %v924 = vunpack.c.l.b16 %v266
        %v925 = vunpack.c.h.b16 %v266
        %v926 = vunpack.c.l.b16 %v267
        %v927 = vunpack.c.h.b16 %v267
        %v928 = vunpack.c.l.b16 %v268
        %v929 = vunpack.c.h.b16 %v268
        %v930 = vunpack.c.l.b16 %v269
        %v931 = vunpack.c.h.b16 %v269
        %v932 = vunpack.c.l.b16 %v270
        %v933 = vunpack.c.h.b16 %v270
        %v934 = vunpack.c.l.b16 %v271
        %v935 = vunpack.c.h.b16 %v271
        %v936 = vunpack.c.l.b16 %v272
        %v937 = vunpack.c.h.b16 %v272
        %v938 = vunpack.c.l.b16 %v273
        %v939 = vunpack.c.h.b16 %v273
        %v940 = vunpack.c.l.b16 %v274
        %v941 = vunpack.c.h.b16 %v274
        %v942 = vunpack.c.l.b16 %v275
        %v943 = vunpack.c.h.b16 %v275
        %v944 = vunpack.c.l.b16 %v276
        %v945 = vunpack.c.h.b16 %v276
        %v946 = vunpack.c.l.b16 %v277
        %v947 = vunpack.c.h.b16 %v277
        %v948 = vunpack.c.l.b16 %v278
        %v949 = vunpack.c.h.b16 %v278
        %v950 = vunpack.c.l.b16 %v279
        %v951 = vunpack.c.h.b16 %v279
        %v952 = vunpack.c.l.b16 %v280
        %v953 = vunpack.c.h.b16 %v280
        %v954 = vunpack.c.l.b16 %v281
        %v955 = vunpack.c.h.b16 %v281
        %v956 = vunpack.c.l.b16 %v282
        %v957 = vunpack.c.h.b16 %v282
        %v958 = vunpack.c.l.b16 %v283
        %v959 = vunpack.c.h.b16 %v283
        %v960 = vunpack.c.l.b16 %v284
        %v961 = vunpack.c.h.b16 %v284
        %v962 = vunpack.c.l.b16 %v285
        %v963 = vunpack.c.h.b16 %v285
        %v964 = vunpack.c.l.b16 %v286
        %v965 = vunpack.c.h.b16 %v286
        %v966 = vunpack.c.l.b16 %v287
        %v967 = vunpack.c.h.b16 %v287
        %v968 = vunpack.c.l.b16 %v288
        %v969 = vunpack.c.h.b16 %v288
        %v970 = vunpack.c.l.b16 %v289
        %v971 = vunpack.c.h.b16 %v289
        %v972 = vunpack.c.l.b16 %v290
        %v973 = vunpack.c.h.b16 %v290
        %v974 = vunpack.c.l.b16 %v291
        %v975 = vunpack.c.h.b16 %v291
        %v976 = vunpack.c.l.b16 %v292
        %v977 = vunpack.c.h.b16 %v292
        %v978 = vunpack.c.l.b16 %v293
        %v979 = vunpack.c.h.b16 %v293
        %v980 = vunpack.c.l.b16 %v294
        %v981 = vunpack.c.h.b16 %v294
        %v982 = vunpack.c.l.b16 %v295
        %v983 = vunpack.c.h.b16 %v295
        %v984 = vunpack.c.l.b16 %v296
        %v985 = vunpack.c.h.b16 %v296
        %v986 = vunpack.c.l.b16 %v297
        %v987 = vunpack.c.h.b16 %v297
        %v988 = vunpack.c.l.b16 %v298
        %v989 = vunpack.c.h.b16 %v298
        %v990 = vunpack.c.l.b16 %v299
        %v991 = vunpack.c.h.b16 %v299
        %v992 = vunpack.c.l.b16 %v300
        %v993 = vunpack.c.h.b16 %v300
        %v994 = vunpack.c.l.b16 %v301
        %v995 = vunpack.c.h.b16 %v301
        %v996 = vunpack.c.l.b16 %v302
        %v997 = vunpack.c.h.b16 %v302
        %v998 = vunpack.c.l.b16 %v303
        %v999 = vunpack.c.h.b16 %v303
        %v1000 = vunpack.c.l.b16 %v304
        %v1001 = vunpack.c.h.b16 %v304
        %v1002 = vunpack.c.l.b16 %v305
        %v1003 = vunpack.c.h.b16 %v305
        %v1004 = vunpack.c.l.b16 %v306
        %v1005 = vunpack.c.h.b16 %v306
        %v1006 = vunpack.c.l.b16 %v307
        %v1007 = vunpack.c.h.b16 %v307
        %v1008 = vunpack.c.l.b16 %v308
        %v1009 = vunpack.c.h.b16 %v308
        %v1010 = vunpack.c.l.b16 %v309
        %v1011 = vunpack.c.h.b16 %v309
        %v1012 = vunpack.c.l.b16 %v310
        %v1013 = vunpack.c.h.b16 %v310
        %v1014 = vunpack.c.l.b16 %v311
        %v1015 = vunpack.c.h.b16 %v311
        %v1016 = vunpack.c.l.b16 %v312
        %v1017 = vunpack.c.h.b16 %v312
        %v1018 = vunpack.c.l.b16 %v313
        %v1019 = vunpack.c.h.b16 %v313
        %v1020 = vunpack.c.l.b16 %v314
        %v1021 = vunpack.c.h.b16 %v314
        %v1022 = vunpack.c.l.b16 %v315
        %v1023 = vunpack.c.h.b16 %v315
        %v1024 = vunpack.c.l.b16 %v316
        %v1025 = vunpack.c.h.b16 %v316
        %v1026 = vunpack.c.l.b16 %v317
        %v1027 = vunpack.c.h.b16 %v317
        %v1028 = vunpack.c.l.b16 %v318
        %v1029 = vunpack.c.h.b16 %v318
        %v1030 = vunpack.c.l.b16 %v319
        %v1031 = vunpack.c.h.b16 %v319
        %v1032 = vunpack.c.l.b16 %v320
        %v1033 = vunpack.c.h.b16 %v320
        %v1034 = vunpack.c.l.b16 %v321
        %v1035 = vunpack.c.h.b16 %v321
        %v1036 = vunpack.c.l.b16 %v322
        %v1037 = vunpack.c.h.b16 %v322
        %v1038 = vunpack.c.l.b16 %v323
        %v1039 = vunpack.c.h.b16 %v323
        %v1040 = vunpack.c.l.b16 %v324
        %v1041 = vunpack.c.h.b16 %v324
        %v1042 = vunpack.c.l.b16 %v325
        %v1043 = vunpack.c.h.b16 %v325
        %v1044 = vunpack.c.l.b16 %v326
        %v1045 = vunpack.c.h.b16 %v326
        %v1046 = vunpack.c.l.b16 %v327
        %v1047 = vunpack.c.h.b16 %v327
        %v1048 = vpack.c.b16 %v924, %v920
        %v1049 = vpack.c.b16 %v925, %v921
        %v1050 = vpack.c.b16 %v926, %v922
        %v1051 = vpack.c.b16 %v927, %v923
        %v1052 = vpack.c.b16 %v932, %v928
        %v1053 = vpack.c.b16 %v933, %v929
        %v1054 = vpack.c.b16 %v934, %v930
        %v1055 = vpack.c.b16 %v935, %v931
        %v1056 = vpack.c.b16 %v940, %v936
        %v1057 = vpack.c.b16 %v941, %v937
        %v1058 = vpack.c.b16 %v942, %v938
        %v1059 = vpack.c.b16 %v943, %v939
        %v1060 = vpack.c.b16 %v948, %v944
        %v1061 = vpack.c.b16 %v949, %v945
        %v1062 = vpack.c.b16 %v950, %v946
        %v1063 = vpack.c.b16 %v951, %v947
        %v1064 = vpack.c.b16 %v956, %v952
        %v1065 = vpack.c.b16 %v957, %v953
        %v1066 = vpack.c.b16 %v958, %v954
        %v1067 = vpack.c.b16 %v959, %v955
        %v1068 = vpack.c.b16 %v964, %v960
        %v1069 = vpack.c.b16 %v965, %v961
        %v1070 = vpack.c.b16 %v966, %v962
        %v1071 = vpack.c.b16 %v967, %v963
        %v1072 = vpack.c.b16 %v972, %v968
        %v1073 = vpack.c.b16 %v973, %v969
        %v1074 = vpack.c.b16 %v974, %v970
        %v1075 = vpack.c.b16 %v975, %v971
        %v1076 = vpack.c.b16 %v980, %v976
        %v1077 = vpack.c.b16 %v981, %v977
        %v1078 = vpack.c.b16 %v982, %v978
        %v1079 = vpack.c.b16 %v983, %v979
        %v1080 = vpack.c.b16 %v988, %v984
        %v1081 = vpack.c.b16 %v989, %v985
        %v1082 = vpack.c.b16 %v990, %v986
        %v1083 = vpack.c.b16 %v991, %v987
        %v1084 = vpack.c.b16 %v996, %v992
        %v1085 = vpack.c.b16 %v997, %v993
        %v1086 = vpack.c.b16 %v998, %v994
        %v1087 = vpack.c.b16 %v999, %v995
        %v1088 = vpack.c.b16 %v1004, %v1000
        %v1089 = vpack.c.b16 %v1005, %v1001
        %v1090 = vpack.c.b16 %v1006, %v1002
        %v1091 = vpack.c.b16 %v1007, %v1003
        %v1092 = vpack.c.b16 %v1012, %v1008
        %v1093 = vpack.c.b16 %v1013, %v1009
        %v1094 = vpack.c.b16 %v1014, %v1010
        %v1095 = vpack.c.b16 %v1015, %v1011
        %v1096 = vpack.c.b16 %v1020, %v1016
        %v1097 = vpack.c.b16 %v1021, %v1017
        %v1098 = vpack.c.b16 %v1022, %v1018
        %v1099 = vpack.c.b16 %v1023, %v1019
        %v1100 = vpack.c.b16 %v1028, %v1024
        %v1101 = vpack.c.b16 %v1029, %v1025
        %v1102 = vpack.c.b16 %v1030, %v1026
        %v1103 = vpack.c.b16 %v1031, %v1027
        %v1104 = vpack.c.b16 %v1036, %v1032
        %v1105 = vpack.c.b16 %v1037, %v1033
        %v1106 = vpack.c.b16 %v1038, %v1034
        %v1107 = vpack.c.b16 %v1039, %v1035
        %v1108 = vpack.c.b16 %v1044, %v1040
        %v1109 = vpack.c.b16 %v1045, %v1041
        %v1110 = vpack.c.b16 %v1046, %v1042
        %v1111 = vpack.c.b16 %v1047, %v1043
        %1176 = vmatprep.subr.bf16.mxu0 %v1077
        %1177 = vmatpush1.bf16.msra.mxu0 %v1076
        %1178 = vmatprep.subr.bf16.mxu0 %v1073
        %1179 = vmatpush1.bf16.msra.mxu0 %v1072
        %1180 = vmatprep.subr.bf16.mxu0 %v1069
        %1181 = vmatpush1.bf16.msra.mxu0 %v1068
        %1182 = vmatprep.subr.bf16.mxu0 %v1065
        %1183 = vmatpush1.bf16.msra.mxu0 %v1064
        %1184 = vmatprep.subr.bf16.mxu0 %v1061
        %1185 = vmatpush1.bf16.msra.mxu0 %v1060
        %1186 = vmatprep.subr.bf16.mxu0 %v1057
        %1187 = vmatpush1.bf16.msra.mxu0 %v1056
        %1188 = vmatprep.subr.bf16.mxu0 %v1053
        %1189 = vmatpush1.bf16.msra.mxu0 %v1052
        %1190 = vmatprep.subr.bf16.mxu0 %v1049
        %1191 = vmatpush1.bf16.msra.mxu0 %v1048
        %1192 = vmatprep.subr.bf16.mxu0 %v1109
        %1193 = vmatpush2.bf16.msra.mxu0 %v1108
        %1194 = vmatprep.subr.bf16.mxu0 %v1105
        %1195 = vmatpush2.bf16.msra.mxu0 %v1104
        %1196 = vmatprep.subr.bf16.mxu0 %v1101
        %1197 = vmatpush2.bf16.msra.mxu0 %v1100
        %1198 = vmatprep.subr.bf16.mxu0 %v1097
        %1199 = vmatpush2.bf16.msra.mxu0 %v1096
        %1200 = vmatprep.subr.bf16.mxu0 %v1093
        %1201 = vmatpush2.bf16.msra.mxu0 %v1092
        %1202 = vmatprep.subr.bf16.mxu0 %v1089
        %1203 = vmatpush2.bf16.msra.mxu0 %v1088
        %1204 = vmatprep.subr.bf16.mxu0 %v1085
        %1205 = vmatpush2.bf16.msra.mxu0 %v1084
        %1206 = vmatprep.subr.bf16.mxu0 %v1081
        %1207 = vmatpush2.bf16.msra.mxu0 %v1080
        %1208 = vmatprep.mubr.bf16.mxu0 %v834
        %1209 = vmatmul.mubr.bf16.gmra.mxu0 %v833
        %v1210 = vpop.f32.mrf.mxu0
        %v1211 = vadd.f32 %v839, %v1210
        %v1212 = vpop.f32.mrf.mxu0
        %v1213 = vadd.f32 %v843, %v1212
        %v1214 = vpop.f32.mrf.mxu0
        %v1215 = vpop.f32.mrf.mxu0
        %1216 = vdwg.mxu0
        %1217 = vmatprep.subr.bf16.mxu0 %v1079
        %1218 = vmatpush1.bf16.msra.mxu0 %v1078
        %1219 = vmatprep.subr.bf16.mxu0 %v1075
        %1220 = vmatpush1.bf16.msra.mxu0 %v1074
        %1221 = vmatprep.subr.bf16.mxu0 %v1071
        %1222 = vmatpush1.bf16.msra.mxu0 %v1070
        %1223 = vmatprep.subr.bf16.mxu0 %v1067
        %1224 = vmatpush1.bf16.msra.mxu0 %v1066
        %1225 = vmatprep.subr.bf16.mxu0 %v1063
        %1226 = vmatpush1.bf16.msra.mxu0 %v1062
        %1227 = vmatprep.subr.bf16.mxu0 %v1059
        %1228 = vmatpush1.bf16.msra.mxu0 %v1058
        %1229 = vmatprep.subr.bf16.mxu0 %v1055
        %1230 = vmatpush1.bf16.msra.mxu0 %v1054
        %1231 = vmatprep.subr.bf16.mxu0 %v1051
        %1232 = vmatpush1.bf16.msra.mxu0 %v1050
        %1233 = vmatprep.subr.bf16.mxu0 %v1111
        %1234 = vmatpush2.bf16.msra.mxu0 %v1110
        %1235 = vmatprep.subr.bf16.mxu0 %v1107
        %1236 = vmatpush2.bf16.msra.mxu0 %v1106
        %1237 = vmatprep.subr.bf16.mxu0 %v1103
        %1238 = vmatpush2.bf16.msra.mxu0 %v1102
        %1239 = vmatprep.subr.bf16.mxu0 %v1099
        %1240 = vmatpush2.bf16.msra.mxu0 %v1098
        %1241 = vmatprep.subr.bf16.mxu0 %v1095
        %1242 = vmatpush2.bf16.msra.mxu0 %v1094
        %1243 = vmatprep.subr.bf16.mxu0 %v1091
        %1244 = vmatpush2.bf16.msra.mxu0 %v1090
        %1245 = vmatprep.subr.bf16.mxu0 %v1087
        %1246 = vmatpush2.bf16.msra.mxu0 %v1086
        %1247 = vmatprep.subr.bf16.mxu0 %v1083
        %1248 = vmatpush2.bf16.msra.mxu0 %v1082
        %1249 = vmatprep.mubr.bf16.mxu0 %v834
        %1250 = vmatmul.mubr.bf16.gmra.mxu0 %v833
        %v1251 = vpop.f32.mrf.mxu0
        %v1252 = vadd.f32 %v847, %v1251
        %v1253 = vpop.f32.mrf.mxu0
        %v1254 = vadd.f32 %v851, %v1253
        %v1255 = vpop.f32.mrf.mxu0
        %v1256 = vpop.f32.mrf.mxu0
        %1257 = vdwg.mxu0
        %v1258 = vmax.f32 %v1211, 0.0
        %v1259 = vmax.f32 %v1213, 0.0
        %v1260 = vmax.f32 %v1252, 0.0
        %v1261 = vmax.f32 %v1254, 0.0
        %v1262 = vpack.c.bf16 %v1258, %v1258
        %v1263 = vpack.c.bf16 %v1259, %v1259
        %v1264 = vpack.c.bf16 %v1260, %v1260
        %v1265 = vpack.c.bf16 %v1261, %v1261
        %v1268 = vunpack.c.l.b16 %v198
        %v1269 = vunpack.c.h.b16 %v198
        %v1270 = vunpack.c.l.b16 %v199
        %v1271 = vunpack.c.h.b16 %v199
        %v1272 = vpack.c.b16 %v1268, %v1268
        %v1273 = vpack.c.b16 %v1269, %v1269
        %v1274 = vpack.c.b16 %v1270, %v1270
        %v1275 = vpack.c.b16 %v1271, %v1271
        %1280 = vmatprep.subr.bf16.mxu0 0
        %1281 = vmatpush1.bf16.xpose.msra.mxu0 0
        %1282 = vmatprep.subr.bf16.mxu0 0
        %1283 = vmatpush1.bf16.xpose.msra.mxu0 0
        %1284 = vmatprep.subr.bf16.mxu0 0
        %1285 = vmatpush1.bf16.xpose.msra.mxu0 0
        %1286 = vmatprep.subr.bf16.mxu0 0
        %1287 = vmatpush1.bf16.xpose.msra.mxu0 0
        %1288 = vmatprep.subr.bf16.mxu0 0
        %1289 = vmatpush1.bf16.xpose.msra.mxu0 0
        %1290 = vmatprep.subr.bf16.mxu0 0
        %1291 = vmatpush1.bf16.xpose.msra.mxu0 0
        %1292 = vmatprep.subr.bf16.mxu0 0
        %1293 = vmatpush1.bf16.xpose.msra.mxu0 0
        %1294 = vmatprep.subr.bf16.mxu0 %v1273
        %1295 = vmatpush1.bf16.xpose.msra.mxu0 %v1272
        %1296 = vmatprep.subr.bf16.mxu0 0
        %1297 = vmatpush2.bf16.xpose.msra.mxu0 0
        %1298 = vmatprep.subr.bf16.mxu0 0
        %1299 = vmatpush2.bf16.xpose.msra.mxu0 0
        %1300 = vmatprep.subr.bf16.mxu0 0
        %1301 = vmatpush2.bf16.xpose.msra.mxu0 0
        %1302 = vmatprep.subr.bf16.mxu0 0
        %1303 = vmatpush2.bf16.xpose.msra.mxu0 0
        %1304 = vmatprep.subr.bf16.mxu0 0
        %1305 = vmatpush2.bf16.xpose.msra.mxu0 0
        %1306 = vmatprep.subr.bf16.mxu0 0
        %1307 = vmatpush2.bf16.xpose.msra.mxu0 0
        %1308 = vmatprep.subr.bf16.mxu0 0
        %1309 = vmatpush2.bf16.xpose.msra.mxu0 0
        %1310 = vmatprep.subr.bf16.mxu0 0
        %1311 = vmatpush2.bf16.xpose.msra.mxu0 0
        %1312 = vmatprep.mubr.bf16.mxu0 %v1263
        %1313 = vmatmul.mubr.bf16.gmra.mxu0 %v1262
        %v1314 = vpop.f32.mrf.mxu0
        %v1315 = vadd.f32 %v336, %v1314
        %v1316 = vpop.f32.mrf.mxu0
        %v1317 = vpop.f32.mrf.mxu0
        %v1318 = vpop.f32.mrf.mxu0
        %1319 = vdwg.mxu0
        %1320 = vmatprep.subr.bf16.mxu0 0
        %1321 = vmatpush1.bf16.xpose.msra.mxu0 0
        %1322 = vmatprep.subr.bf16.mxu0 0
        %1323 = vmatpush1.bf16.xpose.msra.mxu0 0
        %1324 = vmatprep.subr.bf16.mxu0 0
        %1325 = vmatpush1.bf16.xpose.msra.mxu0 0
        %1326 = vmatprep.subr.bf16.mxu0 0
        %1327 = vmatpush1.bf16.xpose.msra.mxu0 0
        %1328 = vmatprep.subr.bf16.mxu0 0
        %1329 = vmatpush1.bf16.xpose.msra.mxu0 0
        %1330 = vmatprep.subr.bf16.mxu0 0
        %1331 = vmatpush1.bf16.xpose.msra.mxu0 0
        %1332 = vmatprep.subr.bf16.mxu0 0
        %1333 = vmatpush1.bf16.xpose.msra.mxu0 0
        %1334 = vmatprep.subr.bf16.mxu0 %v1275
        %1335 = vmatpush1.bf16.xpose.msra.mxu0 %v1274
        %1336 = vmatprep.subr.bf16.mxu0 0
        %1337 = vmatpush2.bf16.xpose.msra.mxu0 0
        %1338 = vmatprep.subr.bf16.mxu0 0
        %1339 = vmatpush2.bf16.xpose.msra.mxu0 0
        %1340 = vmatprep.subr.bf16.mxu0 0
        %1341 = vmatpush2.bf16.xpose.msra.mxu0 0
        %1342 = vmatprep.subr.bf16.mxu0 0
        %1343 = vmatpush2.bf16.xpose.msra.mxu0 0
        %1344 = vmatprep.subr.bf16.mxu0 0
        %1345 = vmatpush2.bf16.xpose.msra.mxu0 0
        %1346 = vmatprep.subr.bf16.mxu0 0
        %1347 = vmatpush2.bf16.xpose.msra.mxu0 0
        %1348 = vmatprep.subr.bf16.mxu0 0
        %1349 = vmatpush2.bf16.xpose.msra.mxu0 0
        %1350 = vmatprep.subr.bf16.mxu0 0
        %1351 = vmatpush2.bf16.xpose.msra.mxu0 0
        %1352 = vmatprep.mubr.bf16.mxu0 %v1265
        %1353 = vmatmul.mubr.bf16.gmra.mxu0 %v1264
        %v1354 = vpop.f32.mrf.mxu0
        %v1355 = vadd.f32 %v1315, %v1354
        %v1356 = vpop.f32.mrf.mxu0
        %v1357 = vpop.f32.mrf.mxu0
        %v1358 = vpop.f32.mrf.mxu0
        %1359 = vdwg.mxu0
        %1360 = vst.msk [vmem:[%s193] sm:$0xff] %vm337, %v1355
        %p1361 = scmp.lt.s32.totalorder %s16, 1
        %s1362 = scalar_select %p1361, %s16, 1
        %s1363 = smul.addr %s1362, 8
        %s1364 = scalar_lea.vmem %s3, %s1363
        // Predicated region
        $region41: #{tpu_custom_call.1} parent=31 // pred_check
          %p1365 = pneg %p102
        $region42: #{tpu_custom_call.1} parent=31 // pred_check_branch
          %1367 = sbr.rel (%p1365) target = $region44
        $region43: #{tpu_custom_call.1} parent=31 // pred_region
          _
        $region44: #{tpu_custom_call.1} parent=31 // pred_fallthru
          _
      $region32: #{tpu_custom_call.1} parent=5 // pred_fallthru
        _
      %p1368 = scmp.le.s32.totalorder 2, %s11
      // Predicated region
      $region45: #{tpu_custom_call.1} parent=5 // pred_check
        %p1369 = pneg %p1368
      $region46: #{tpu_custom_call.1} parent=5 // pred_check_branch
        %1371 = sbr.rel (%p1369) target = $region48
      $region47: #{tpu_custom_call.1} parent=5 // pred_region
        %s1372 = ssub.s32 %s11, 2
        // Predicated region
        $region49: #{tpu_custom_call.1} parent=47 // pred_check
          %p1373 = pneg %p108
        $region50: #{tpu_custom_call.1} parent=47 // pred_check_branch
          %1375 = sbr.rel (%p1373) target = $region52
        $region51: #{tpu_custom_call.1} parent=47 // pred_region
          %p1376 = scmp.lt.s32.totalorder %s17, 1
          %s1377 = scalar_select %p1376, %s17, 1
          %s1378 = smul.addr %s1377, 8
          %s1379 = scalar_lea.vmem %s3, %s1378
        $region52: #{tpu_custom_call.1} parent=47 // pred_fallthru
          _
      $region48: #{tpu_custom_call.1} parent=5 // pred_fallthru
        _
    $region6: #{tpu_custom_call.1} parent=1 // loop_footer
      %s15 = sadd.s32 1, %s11
    $region7: #{tpu_custom_call.1} parent=1 // loop_footer_branch
      %10 = sbr.rel target = $region3
    $region8: #{tpu_custom_call.1} parent=1 // loop_exit
      _
    %1380 = vsyncpa [#allocation3], 1
    %s1381 = scalar_lea.sflag [#allocation3], 1
    %1382 = vsyncpa %s1381, 1
    %1383 = vsyncpa [#allocation5], 1

</llo_original>
